<compile_context>
chip_gen: v7x
topology: tpu7x:2x2x1
jax: 0.10.0
libtpu: 0.0.40
codegen_flags: <defaults>
</compile_context>

<pallas_src>
import functools
import math

import jax
import jax.numpy as jnp
from jax import lax
from jax.experimental import pallas as pl
from jax.experimental.pallas import tpu as pltpu


def _round_up(x, m):
    return ((x + m - 1) // m) * m


def _layer_attention_kernel(q_ref, k_ref, wq_ref, bq_ref, wk_ref, bk_ref,
                            o_ref, qp_ref, *, inv_sqrt_h, compute_dtype):
    bt, lq, dq = q_ref.shape
    _, tk, h = k_ref.shape

    # q-projection: computed once per batch tile (grid axis 1 is the Lk tile
    # axis), cached in VMEM scratch in compute_dtype. Bias add and the
    # 1/sqrt(H) scale (folded into qp: Lq*H elems, not Lq*Lk) are fp32.
    @pl.when(pl.program_id(1) == 0)
    def _():
        q = q_ref[...].reshape(bt * lq, dq).astype(compute_dtype)
        qp = lax.dot_general(q, wq_ref[...],
                             dimension_numbers=(((1,), (0,)), ((), ())),
                             preferred_element_type=jnp.float32)
        qp = (qp + bq_ref[...]) * inv_sqrt_h
        qp_ref[...] = qp.reshape(bt, lq, h).astype(qp_ref.dtype)

    # k-projection for this TK column tile. Batch folded into the sublane (M)
    # axis -> one MXU matmul instead of bt tiny ones. fp32 accumulation.
    k = k_ref[...].reshape(bt * tk, h).astype(compute_dtype)
    kp = lax.dot_general(k, wk_ref[...],
                         dimension_numbers=(((1,), (0,)), ((), ())),
                         preferred_element_type=jnp.float32)
    kp = (kp + bk_ref[...]).reshape(bt, tk, h).astype(compute_dtype)

    # scores = qp @ kp^T as a batched dot_general contracting the LAST dim of
    # both operands -> MXU fed directly, no kp.T / XLU relayout.
    scores = lax.dot_general(qp_ref[...], kp,
                             dimension_numbers=(((2,), (2,)), ((0,), (0,))),
                             preferred_element_type=jnp.float32)  # (bt, lq, tk)
    o_ref[...] = scores.astype(o_ref.dtype)


def _vmem_budget_and_cores():
    """Generation-aware scoped-VMEM budget (bytes) and whether the chip has
    two TensorCores (v7x)."""
    kind = ""
    try:
        kind = jax.devices()[0].device_kind.lower()
    except Exception:
        pass
    two_cores = "v7" in kind
    cap = None
    try:
        cap = getattr(pltpu.get_tpu_info(), "vmem_capacity_bytes", None)
    except Exception:
        cap = None
    if cap is None:
        cap = (64 << 20) if two_cores else (128 << 20)
    if two_cores:
        cap = min(cap, 64 << 20)          # v7x: 64 MiB per TensorCore
    # Leave ~3/8 of physical for Mosaic internal scratch / spills; never ask
    # for more than ~96 MiB even on 128 MiB parts.
    budget = min(int(cap) * 5 // 8, 96 << 20)
    return budget, two_cores


def _estimate_vmem_bytes(bt, tk, lq_p, dq, h, in_bytes, act_bytes):
    """Honest per-step VMEM footprint: double-buffered streamed blocks,
    resident weights/biases, qp scratch, in-kernel fp32/compute intermediates,
    plus headroom for Mosaic internal scratch."""
    blocks = 2 * bt * lq_p * dq * in_bytes          # query block (dbl-buffered)
    blocks += 2 * bt * tk * h * in_bytes            # key block
    blocks += 2 * bt * lq_p * tk * 4                # fp32 output block
    weights = 2 * ((dq * h + h * h) * act_bytes + 2 * h * 4)   # W + biases
    scratch = bt * lq_p * h * act_bytes             # cached q-projection
    interm = bt * lq_p * h * (4 + act_bytes)        # qp fp32 + compute copy
    interm += bt * tk * h * (4 + act_bytes)         # kp fp32 + compute copy
    interm += bt * lq_p * tk * 4                    # scores before store
    headroom = 2 << 20
    return blocks + weights + scratch + interm + headroom


def _pick_tiling(B, lq_p, lk_128, dq, h, in_bytes, act_bytes,
                 budget, two_cores, tk_target=512):
    """Pick (batch_tile, k_tile). TK is a multiple of 128 (lane-dense,
    unmasked output stores), as large as the budget allows up to tk_target.
    bt is the largest divisor of B that fits; on v7x keep >= 2 parallel grid
    steps so both TensorCores get work."""
    tk = max(128, (min(tk_target, lk_128) // 128) * 128)
    while tk > 128 and _estimate_vmem_bytes(1, tk, lq_p, dq, h,
                                            in_bytes, act_bytes) > budget:
        tk -= 128
    max_bt = B
    if two_cores and B >= 2:
        max_bt = max(1, B // 2)
    bt = 1
    for d in range(1, B + 1):
        if (B % d == 0 and d <= max_bt and
                _estimate_vmem_bytes(d, tk, lq_p, dq, h,
                                     in_bytes, act_bytes) <= budget):
            bt = d
    return bt, tk


def layer_attention(query, key, wq, bq, wk, bk, *,
                    compute_dtype=jnp.bfloat16,
                    batch_tile=None, k_tile=None):
    """query: (B, Lq, Dq); key: (B, Lk, H); wq: (Dq, H); wk: (H, H).
    Returns (B, Lq, Lk) fp32 attention scores (q_proj(query) @ k_proj(key)^T
    / sqrt(H)), matching the PyTorch LayerAttention forward."""
    B, Lq, Dq = query.shape
    _, Lk, H = key.shape
    assert wq.shape == (Dq, H) and wk.shape == (H, H)

    act_bytes = jnp.dtype(compute_dtype).itemsize
    in_bytes = jnp.dtype(query.dtype).itemsize   # inputs cast in-kernel

    # Sublane-clean Lq padding: 16 rows for bf16 packing, 8 for fp32.
    sub = 16 if act_bytes < 4 else 8
    Lq_p = _round_up(Lq, sub)

    budget, two_cores = _vmem_budget_and_cores()
    lk_128 = _round_up(Lk, 128)
    bt, tk = _pick_tiling(B, Lq_p, lk_128, Dq, H, in_bytes, act_bytes,
                          budget, two_cores)
    if k_tile is not None:
        tk = k_tile
    if batch_tile is not None:
        bt = batch_tile
    assert B % bt == 0, "batch_tile must divide B"
    assert tk % 128 == 0, "k_tile must be a multiple of 128"

    # Pad Lk up to a multiple of TK (at most TK-1 extra padded columns; they
    # are sliced off below).
    Lk_p = _round_up(Lk, tk)

    if Lq_p != Lq:
        query = jnp.pad(query, ((0, 0), (0, Lq_p - Lq), (0, 0)))
    if Lk_p != Lk:
        key = jnp.pad(key, ((0, 0), (0, Lk_p - Lk), (0, 0)))

    # Only the (tiny) weights are cast in the wrapper; activations stay in
    # their HBM dtype and are cast inside the kernel. Biases stay fp32 so the
    # elementwise adds/scales are fp32 on every chip generation.
    wq_c = wq.astype(compute_dtype)
    wk_c = wk.astype(compute_dtype)
    bq2 = bq.reshape(1, H).astype(jnp.float32)
    bk2 = bk.reshape(1, H).astype(jnp.float32)

    kernel = functools.partial(
        _layer_attention_kernel,
        inv_sqrt_h=1.0 / math.sqrt(H),
        compute_dtype=compute_dtype)

    # TODO(synk): if xprof shows exposed DMA on the key/output streams on v7x
    # (H is tiny so per-tile compute is short), add
    # pipeline_mode=pl.Buffered(3) to the key in_spec and the out_spec.
    out = pl.pallas_call(
        kernel,
        out_shape=jax.ShapeDtypeStruct((B, Lq_p, Lk_p), jnp.float32),
        grid_spec=pltpu.PrefetchScalarGridSpec(
            num_scalar_prefetch=0,
            grid=(B // bt, Lk_p // tk),
            in_specs=[
                # query: constant along the TK axis -> re-DMA'd only when the
                # batch tile changes.
                pl.BlockSpec((bt, Lq_p, Dq), lambda b, k: (b, 0, 0)),
                # key: streamed in (bt, TK, H) column tiles.
                pl.BlockSpec((bt, tk, H), lambda b, k: (b, k, 0)),
                # Weights / biases: constant index maps -> stay resident.
                pl.BlockSpec((Dq, H), lambda b, k: (0, 0)),
                pl.BlockSpec((1, H), lambda b, k: (0, 0)),
                pl.BlockSpec((H, H), lambda b, k: (0, 0)),
                pl.BlockSpec((1, H), lambda b, k: (0, 0)),
            ],
            out_specs=pl.BlockSpec((bt, Lq_p, tk), lambda b, k: (b, 0, k)),
            scratch_shapes=[pltpu.VMEM((bt, Lq_p, H), compute_dtype)],
        ),
        compiler_params=pltpu.CompilerParams(
            dimension_semantics=("parallel", "arbitrary"),
            vmem_limit_bytes=budget),
    )(query, key, wq_c, bq2, wk_c, bk2)

    if Lq_p != Lq or Lk_p != Lk:
        out = out[:, :Lq, :Lk]
    return out


if __name__ == "__main__":
    # Small shapes implied by the module: query_dim != hidden_size allowed.
    B, Lq, Lk = 2, 8, 8
    query_dim, hidden_size = 48, 32

    key0 = jax.random.PRNGKey(0)
    k_q, k_k, k_wq, k_bq, k_wk, k_bk = jax.random.split(key0, 6)

    query = jax.random.normal(k_q, (B, Lq, query_dim), dtype=jnp.float32)
    key_in = jax.random.normal(k_k, (B, Lk, hidden_size), dtype=jnp.float32)

    # torch Linear weight is (out, in); stored here pre-transposed as (in, out).
    wq = jax.random.normal(k_wq, (query_dim, hidden_size), dtype=jnp.float32) * 0.02
    bq = jax.random.normal(k_bq, (hidden_size,), dtype=jnp.float32) * 0.02
    wk = jax.random.normal(k_wk, (hidden_size, hidden_size), dtype=jnp.float32) * 0.02
    bk = jax.random.normal(k_bk, (hidden_size,), dtype=jnp.float32) * 0.02

    # Pure-JAX reference.
    q_ref = query @ wq + bq
    k_ref = key_in @ wk + bk
    ref = jnp.einsum("bqh,bkh->bqk", q_ref, k_ref) / math.sqrt(hidden_size)

    # fp32-operand path: tight check against the reference.
    out_f32 = layer_attention(query, key_in, wq, bq, wk, bk,
                              compute_dtype=jnp.float32)
    jax.block_until_ready(out_f32)
    assert out_f32.shape == (B, Lq, Lk)
    assert jnp.allclose(out_f32, ref, atol=1e-4, rtol=1e-4), "fp32 mismatch"

    # Default bf16-operand / fp32-accumulate path (MXU-native on v5e/v6e/v7x).
    out_bf16 = layer_attention(query, key_in, wq, bq, wk, bk)
    jax.block_until_ready(out_bf16)
    assert out_bf16.shape == (B, Lq, Lk)
    assert jnp.allclose(out_bf16, ref, atol=2e-2, rtol=2e-2), "bf16 mismatch"

    print("KERNEL_OK")
</pallas_src>

<mosaic_0001>
module attributes {stable_mosaic.version = 11 : i64} {
  func.func @_layer_attention_kernel(%arg0: i32, %arg1: i32, %arg2: memref<2x8x48xf32, #tpu.memory_space<vmem>>, %arg3: memref<2x128x32xf32, #tpu.memory_space<vmem>>, %arg4: memref<48x32xf32, #tpu.memory_space<vmem>>, %arg5: memref<1x32xf32, #tpu.memory_space<vmem>>, %arg6: memref<32x32xf32, #tpu.memory_space<vmem>>, %arg7: memref<1x32xf32, #tpu.memory_space<vmem>>, %arg8: memref<2x8x128xf32, #tpu.memory_space<vmem>>, %arg9: memref<2x8x32xf32, #tpu.memory_space<vmem>>) attributes {dimension_semantics = [#tpu.dimension_semantics<parallel>, #tpu.dimension_semantics<arbitrary>], iteration_bounds = array<i64: 1, 1>, scalar_prefetch = 0 : i64, scratch_operands = 1 : i64, tpu.core_type = #tpu.core_type<tc>, window_params = [{transform_indices = @transform_0, window_bounds = array<i64: 2, 8, 48>}, {transform_indices = @transform_1, window_bounds = array<i64: 2, 128, 32>}, {pipeline_mode = #tpu.pipeline_mode<synchronous>, transform_indices = @transform_2, window_bounds = array<i64: 48, 32>}, {pipeline_mode = #tpu.pipeline_mode<synchronous>, transform_indices = @transform_3, window_bounds = array<i64: 1, 32>}, {pipeline_mode = #tpu.pipeline_mode<synchronous>, transform_indices = @transform_4, window_bounds = array<i64: 32, 32>}, {pipeline_mode = #tpu.pipeline_mode<synchronous>, transform_indices = @transform_5, window_bounds = array<i64: 1, 32>}, {transform_indices = @transform_6, window_bounds = array<i64: 2, 8, 128>}]} {
    %c0_i32 = arith.constant 0 : i32
    %0 = arith.cmpi eq, %arg1, %c0_i32 : i32
    %1 = arith.extui %0 : i1 to i32
    %c0_i32_0 = arith.constant 0 : i32
    %2 = arith.cmpi ne, %1, %c0_i32_0 : i32
    scf.if %2 {
      %c0_14 = arith.constant 0 : index
      %c0_15 = arith.constant 0 : index
      %c0_16 = arith.constant 0 : index
      %14 = vector.load %arg2[%c0_14, %c0_15, %c0_16] : memref<2x8x48xf32, #tpu.memory_space<vmem>>, vector<2x8x48xf32>
      %15 = vector.shape_cast %14 : vector<2x8x48xf32> to vector<16x48xf32>
      %c0_17 = arith.constant 0 : index
      %c0_18 = arith.constant 0 : index
      %16 = vector.load %arg4[%c0_17, %c0_18] : memref<48x32xf32, #tpu.memory_space<vmem>>, vector<48x32xf32>
      %cst_19 = arith.constant dense<0.000000e+00> : vector<16x32xf32>
      %17 = tpu.matmul %15, %16, %cst_19 {dimension_numbers = #tpu.dot_dimension_numbers<[1], [0], [0], [1], [0, 0, 1, 1], [], []>} : vector<16x48xf32>, vector<48x32xf32>, vector<16x32xf32> -> vector<16x32xf32>
      %c0_20 = arith.constant 0 : index
      %c0_21 = arith.constant 0 : index
      %18 = vector.load %arg5[%c0_20, %c0_21] : memref<1x32xf32, #tpu.memory_space<vmem>>, vector<1x32xf32>
      %19 = vector.broadcast %18 : vector<1x32xf32> to vector<16x32xf32>
      %20 = arith.addf %17, %19 : vector<16x32xf32>
      %cst_22 = arith.constant 0.176776692 : f32
      %21 = vector.broadcast %cst_22 : f32 to vector<16x32xf32>
      %22 = arith.mulf %20, %21 : vector<16x32xf32>
      %23 = vector.shape_cast %22 : vector<16x32xf32> to vector<2x8x32xf32>
      %c0_23 = arith.constant 0 : index
      %c0_24 = arith.constant 0 : index
      %c0_25 = arith.constant 0 : index
      %24 = vector.load %arg9[%c0_23, %c0_24, %c0_25] : memref<2x8x32xf32, #tpu.memory_space<vmem>>, vector<2x8x32xf32>
      tpu.vector_store %arg9[%c0_23, %c0_24, %c0_25], %23 {strides = array<i32>} : memref<2x8x32xf32, #tpu.memory_space<vmem>>, vector<2x8x32xf32>,
    } else {
    }
    %c0 = arith.constant 0 : index
    %c0_1 = arith.constant 0 : index
    %c0_2 = arith.constant 0 : index
    %3 = vector.load %arg3[%c0, %c0_1, %c0_2] : memref<2x128x32xf32, #tpu.memory_space<vmem>>, vector<2x128x32xf32>
    %4 = vector.shape_cast %3 : vector<2x128x32xf32> to vector<256x32xf32>
    %c0_3 = arith.constant 0 : index
    %c0_4 = arith.constant 0 : index
    %5 = vector.load %arg6[%c0_3, %c0_4] : memref<32x32xf32, #tpu.memory_space<vmem>>, vector<32x32xf32>
    %cst = arith.constant dense<0.000000e+00> : vector<256x32xf32>
    %6 = tpu.matmul %4, %5, %cst {dimension_numbers = #tpu.dot_dimension_numbers<[1], [0], [0], [1], [0, 0, 1, 1], [], []>} : vector<256x32xf32>, vector<32x32xf32>, vector<256x32xf32> -> vector<256x32xf32>
    %c0_5 = arith.constant 0 : index
    %c0_6 = arith.constant 0 : index
    %7 = vector.load %arg7[%c0_5, %c0_6] : memref<1x32xf32, #tpu.memory_space<vmem>>, vector<1x32xf32>
    %8 = vector.broadcast %7 : vector<1x32xf32> to vector<256x32xf32>
    %9 = arith.addf %6, %8 : vector<256x32xf32>
    %10 = vector.shape_cast %9 : vector<256x32xf32> to vector<2x128x32xf32>
    %c0_7 = arith.constant 0 : index
    %c0_8 = arith.constant 0 : index
    %c0_9 = arith.constant 0 : index
    %11 = vector.load %arg9[%c0_7, %c0_8, %c0_9] : memref<2x8x32xf32, #tpu.memory_space<vmem>>, vector<2x8x32xf32>
    %cst_10 = arith.constant dense<0.000000e+00> : vector<2x8x128xf32>
    %12 = tpu.matmul %11, %10, %cst_10 {dimension_numbers = #tpu.dot_dimension_numbers<[2], [2], [1], [1], [0, 0, 0, 1, 1, 1], [0], [0]>} : vector<2x8x32xf32>, vector<2x128x32xf32>, vector<2x8x128xf32> -> vector<2x8x128xf32>
    %c0_11 = arith.constant 0 : index
    %c0_12 = arith.constant 0 : index
    %c0_13 = arith.constant 0 : index
    %13 = vector.load %arg8[%c0_11, %c0_12, %c0_13] : memref<2x8x128xf32, #tpu.memory_space<vmem>>, vector<2x8x128xf32>
    tpu.vector_store %arg8[%c0_11, %c0_12, %c0_13], %12 {strides = array<i32>} : memref<2x8x128xf32, #tpu.memory_space<vmem>>, vector<2x8x128xf32>,
    return
  }
  func.func @transform_0(%arg0: i32, %arg1: i32) -> (i32, i32, i32) {
    %c0_i32 = arith.constant 0 : i32
    %c0_i32_0 = arith.constant 0 : i32
    %c0_i32_1 = arith.constant 0 : i32
    return %arg0, %c0_i32, %c0_i32_0 : i32, i32, i32
  }
  func.func @transform_1(%arg0: i32, %arg1: i32) -> (i32, i32, i32) {
    %c0_i32 = arith.constant 0 : i32
    %c0_i32_0 = arith.constant 0 : i32
    return %arg0, %arg1, %c0_i32 : i32, i32, i32
  }
  func.func @transform_2(%arg0: i32, %arg1: i32) -> (i32, i32) {
    %c0_i32 = arith.constant 0 : i32
    %c0_i32_0 = arith.constant 0 : i32
    %c0_i32_1 = arith.constant 0 : i32
    return %c0_i32, %c0_i32_0 : i32, i32
  }
  func.func @transform_3(%arg0: i32, %arg1: i32) -> (i32, i32) {
    %c0_i32 = arith.constant 0 : i32
    %c0_i32_0 = arith.constant 0 : i32
    %c0_i32_1 = arith.constant 0 : i32
    return %c0_i32, %c0_i32_0 : i32, i32
  }
  func.func @transform_4(%arg0: i32, %arg1: i32) -> (i32, i32) {
    %c0_i32 = arith.constant 0 : i32
    %c0_i32_0 = arith.constant 0 : i32
    %c0_i32_1 = arith.constant 0 : i32
    return %c0_i32, %c0_i32_0 : i32, i32
  }
  func.func @transform_5(%arg0: i32, %arg1: i32) -> (i32, i32) {
    %c0_i32 = arith.constant 0 : i32
    %c0_i32_0 = arith.constant 0 : i32
    %c0_i32_1 = arith.constant 0 : i32
    return %c0_i32, %c0_i32_0 : i32, i32
  }
  func.func @transform_6(%arg0: i32, %arg1: i32) -> (i32, i32, i32) {
    %c0_i32 = arith.constant 0 : i32
    %c0_i32_0 = arith.constant 0 : i32
    return %arg0, %c0_i32, %arg1 : i32, i32, i32
  }
}

</mosaic_0001>

<llo_original>
// kernel: tpu_custom_call.1
$region0: #{tpu_custom_call.1}
  #allocation0 [shape = 'u32[]', space=smem, size = 0x4, offset = 0x4, fixed_abs, tag = 'smem constant byte address 0x4 - core index']
  #allocation1 [shape = 'u32[144,128]{1,0:T(1,128)}', space=vmem, size = 0x12000, scoped, tag = 'internal scratch']
  #allocation2 [shape = 'f32[2,8,32]{2,1,0:T(8,128)}', space=vmem, size = 0x2000, scoped, tag = 'scratch operand']
  %s0 = inlined_call_operand.hbm [shape: f32[2,8,48], index: 0, kind: input, shape index: {}]
  %s1 = inlined_call_operand.hbm [shape: f32[2,128,32], index: 1, kind: input, shape index: {}]
  %s2 = inlined_call_operand.hbm [shape: f32[48,32], index: 2, kind: input, shape index: {}]
  %s3 = inlined_call_operand.hbm [shape: f32[1,32], index: 3, kind: input, shape index: {}]
  %s4 = inlined_call_operand.hbm [shape: f32[32,32], index: 4, kind: input, shape index: {}]
  %s5 = inlined_call_operand.hbm [shape: f32[1,32], index: 5, kind: input, shape index: {}]
  %s6 = inlined_call_operand.hbm [shape: f32[2,8,128], index: 6, kind: output, shape index: {}]
  %s7 = sld [smem:[#allocation0]]
  $region62: #{tpu_custom_call.1} parent=0
    _
  %s9 = ssub.s32 1, %s7
  %s10 = scalar_select 0, %s9, %s7
  $region1: #{tpu_custom_call.1} parent=0
    #allocation3 [shape = 'u8[8192]{0}', space=vmem, size = 0x2000, scoped, tag = 'input window, operand 0, single buffered']
    #allocation4 [shape = 's32[1]{0}', space=sflag, size = 0x4, scoped, tag = 'scoped memory for tpu_custom_call.1']
    #allocation5 [shape = 's32[1]{0}', space=sflag, size = 0x4, scoped, tag = 'scoped memory for tpu_custom_call.1']
    #allocation6 [shape = 'u8[131072]{0}', space=vmem, size = 0x20000, scoped, tag = 'input window, operand 1, single buffered']
    #allocation7 [shape = 's32[1]{0}', space=sflag, size = 0x4, scoped, tag = 'scoped memory for tpu_custom_call.1']
    #allocation8 [shape = 'u8[24576]{0}', space=vmem, size = 0x6000, scoped, tag = 'input window, operand 2, single buffered']
    #allocation9 [shape = 'u8[512]{0}', space=vmem, size = 0x400, scoped, tag = 'input window, operand 3, single buffered']
    #allocation10 [shape = 's32[1]{0}', space=sflag, size = 0x4, scoped, tag = 'scoped memory for tpu_custom_call.1']
    #allocation11 [shape = 'u8[16384]{0}', space=vmem, size = 0x4000, scoped, tag = 'input window, operand 4, single buffered']
    #allocation12 [shape = 'u8[512]{0}', space=vmem, size = 0x400, scoped, tag = 'input window, operand 5, single buffered']
    #allocation13 [shape = 's32[1]{0}', space=sflag, size = 0x4, scoped, tag = 'scoped memory for tpu_custom_call.1']
    #allocation14 [shape = 'u8[8192]{0}', space=vmem, size = 0x2000, scoped, tag = 'output window, operand 0, single buffered']
    %11 = vsyncpa [#allocation4], 0
    %12 = vsyncpa [#allocation7], 0
    %13 = vsyncpa [#allocation10], 0
    %14 = vsyncpa [#allocation13], 0
    %15 = vsyncpa [#allocation5], 0
    // Predicated region
    $region2: #{tpu_custom_call.1} parent=1 // pred_check
      _
    $region3: #{tpu_custom_call.1} parent=1 // pred_check_branch
      %17 = sbr.rel (0) target = $region5
    $region4: #{tpu_custom_call.1} parent=1 // pred_region
      %s19 = ssub.s32 256, 256
      %20 = vsyncadd [#allocation4], %s19
      %s21 = sshll.u32 [#allocation3], 4
      %s22 = int_to_ptr.vmem [resolvable:$true] %s21
      %27 = dma.hbm_to_vmem [thread:$0]  %s0, 256, %s22, [#allocation4], 128, 128, 8
    $region5: #{tpu_custom_call.1} parent=1 // pred_fallthru
      _
    // Predicated region
    $region6: #{tpu_custom_call.1} parent=1 // pred_check
      _
    $region7: #{tpu_custom_call.1} parent=1 // pred_check_branch
      %29 = sbr.rel (0) target = $region9
    $region8: #{tpu_custom_call.1} parent=1 // pred_region
      %s31 = ssub.s32 4096, 4096
      %32 = vsyncadd [#allocation7], %s31
      %s33 = sshll.u32 [#allocation6], 4
      %s34 = int_to_ptr.vmem [resolvable:$true] %s33
      %39 = dma.hbm_to_vmem [thread:$0]  %s1, 4096, %s34, [#allocation7], 128, 128, 8
    $region9: #{tpu_custom_call.1} parent=1 // pred_fallthru
      _
    // Predicated region
    $region10: #{tpu_custom_call.1} parent=1 // pred_check
      _
    $region11: #{tpu_custom_call.1} parent=1 // pred_check_branch
      %41 = sbr.rel (0) target = $region13
    $region12: #{tpu_custom_call.1} parent=1 // pred_region
      %s43 = ssub.s32 768, 768
      %44 = vsyncadd [#allocation7], %s43
      %s45 = sshll.u32 [#allocation8], 4
      %s46 = int_to_ptr.vmem [resolvable:$true] %s45
      %51 = dma.hbm_to_vmem [thread:$0]  %s2, 768, %s46, [#allocation7], 128, 128, 8
    $region13: #{tpu_custom_call.1} parent=1 // pred_fallthru
      _
    // Predicated region
    $region14: #{tpu_custom_call.1} parent=1 // pred_check
      _
    $region15: #{tpu_custom_call.1} parent=1 // pred_check_branch
      %53 = sbr.rel (0) target = $region17
    $region16: #{tpu_custom_call.1} parent=1 // pred_region
      %s55 = ssub.s32 16, 16
      %56 = vsyncadd [#allocation10], %s55
      %s58 = sshll.u32 [#allocation9], 4
      %s59 = int_to_ptr.vmem [resolvable:$true] %s58
      %61 = dma.hbm_to_vmem [thread:$0]  %s3, 16, %s59, [#allocation10]
    $region17: #{tpu_custom_call.1} parent=1 // pred_fallthru
      _
    // Predicated region
    $region18: #{tpu_custom_call.1} parent=1 // pred_check
      _
    $region19: #{tpu_custom_call.1} parent=1 // pred_check_branch
      %63 = sbr.rel (0) target = $region21
    $region20: #{tpu_custom_call.1} parent=1 // pred_region
      %s65 = ssub.s32 512, 512
      %66 = vsyncadd [#allocation10], %s65
      %s67 = sshll.u32 [#allocation11], 4
      %s68 = int_to_ptr.vmem [resolvable:$true] %s67
      %73 = dma.hbm_to_vmem [thread:$0]  %s4, 512, %s68, [#allocation10], 128, 128, 8
    $region21: #{tpu_custom_call.1} parent=1 // pred_fallthru
      _
    // Predicated region
    $region22: #{tpu_custom_call.1} parent=1 // pred_check
      _
    $region23: #{tpu_custom_call.1} parent=1 // pred_check_branch
      %75 = sbr.rel (0) target = $region25
    $region24: #{tpu_custom_call.1} parent=1 // pred_region
      %s77 = ssub.s32 16, 16
      %78 = vsyncadd [#allocation13], %s77
      %s80 = sshll.u32 [#allocation12], 4
      %s81 = int_to_ptr.vmem [resolvable:$true] %s80
      %83 = dma.hbm_to_vmem [thread:$0]  %s5, 16, %s81, [#allocation13]
    $region25: #{tpu_custom_call.1} parent=1 // pred_fallthru
      _
    // Predicated region
    $region26: #{tpu_custom_call.1} parent=1 // pred_check
      _
    $region27: #{tpu_custom_call.1} parent=1 // pred_check_branch
      %85 = sbr.rel (0) target = $region29
    $region28: #{tpu_custom_call.1} parent=1 // pred_region
      %86 = dma.done [#allocation4], 256
    $region29: #{tpu_custom_call.1} parent=1 // pred_fallthru
      _
    // Predicated region
    $region30: #{tpu_custom_call.1} parent=1 // pred_check
      _
    $region31: #{tpu_custom_call.1} parent=1 // pred_check_branch
      %88 = sbr.rel (0) target = $region33
    $region32: #{tpu_custom_call.1} parent=1 // pred_region
      %89 = dma.done [#allocation7], 4096
    $region33: #{tpu_custom_call.1} parent=1 // pred_fallthru
      _
    // Predicated region
    $region34: #{tpu_custom_call.1} parent=1 // pred_check
      _
    $region35: #{tpu_custom_call.1} parent=1 // pred_check_branch
      %91 = sbr.rel (0) target = $region37
    $region36: #{tpu_custom_call.1} parent=1 // pred_region
      %92 = dma.done [#allocation7], 768
    $region37: #{tpu_custom_call.1} parent=1 // pred_fallthru
      _
    // Predicated region
    $region38: #{tpu_custom_call.1} parent=1 // pred_check
      _
    $region39: #{tpu_custom_call.1} parent=1 // pred_check_branch
      %94 = sbr.rel (0) target = $region41
    $region40: #{tpu_custom_call.1} parent=1 // pred_region
      %95 = dma.done [#allocation10], 16
    $region41: #{tpu_custom_call.1} parent=1 // pred_fallthru
      _
    // Predicated region
    $region42: #{tpu_custom_call.1} parent=1 // pred_check
      _
    $region43: #{tpu_custom_call.1} parent=1 // pred_check_branch
      %97 = sbr.rel (0) target = $region45
    $region44: #{tpu_custom_call.1} parent=1 // pred_region
      %98 = dma.done [#allocation10], 512
    $region45: #{tpu_custom_call.1} parent=1 // pred_fallthru
      _
    // Predicated region
    $region46: #{tpu_custom_call.1} parent=1 // pred_check
      _
    $region47: #{tpu_custom_call.1} parent=1 // pred_check_branch
      %100 = sbr.rel (0) target = $region49
    $region48: #{tpu_custom_call.1} parent=1 // pred_region
      %101 = dma.done [#allocation13], 16
    $region49: #{tpu_custom_call.1} parent=1 // pred_fallthru
      _
    %p102 = scmp.eq.s32.totalorder 0, 0
    // Predicated region
    $region50: #{tpu_custom_call.1} parent=1 // pred_check
      %p103 = pneg %p102
    $region51: #{tpu_custom_call.1} parent=1 // pred_check_branch
      %105 = sbr.rel (%p103) target = $region53
    $region52: #{tpu_custom_call.1} parent=1 // pred_region
      %v106 = vld [vmem:[#allocation3] sm:$0xff]
      %v107 = vld [vmem:[#allocation3 + $0x8] sm:$0xff]
      %v108 = vld [vmem:[#allocation8] sm:$0xff]
      %v109 = vld [vmem:[#allocation8 + $0x8] sm:$0xff]
      %v110 = vld [vmem:[#allocation8 + $0x10] sm:$0xff]
      %v111 = vld [vmem:[#allocation8 + $0x18] sm:$0xff]
      %v112 = vld [vmem:[#allocation8 + $0x20] sm:$0xff]
      %v113 = vld [vmem:[#allocation8 + $0x28] sm:$0xff]
      %v114 = vld [vmem:[#allocation9] sm:$0x1]
      %v116 = vlaneseq
      %v117 = vshrl.u32 %v116, 7
      %v118 = vsub.s32 0, %v117
      %v119 = vrot.slane %v114, %v118
      %vm121 = vcmask 392192
      %v123 = vsel %vm121, %v106, 0
      %v126 = vsel %vm121, %v107, 0
      %128 = vmatprep.subr.mxu0 0.0
      %129 = vmatpush1.msra.mxu0 %v108
      %130 = vmatprep.subr.mxu0 0.0
      %131 = vmatpush1.msra.mxu0 %v109
      %132 = vmatprep.subr.mxu0 0.0
      %133 = vmatpush1.msra.mxu0 %v110
      %134 = vmatprep.subr.mxu0 0.0
      %135 = vmatpush1.msra.mxu0 %v111
      %136 = vmatprep.subr.mxu0 0.0
      %137 = vmatpush1.msra.mxu0 %v112
      %138 = vmatprep.subr.mxu0 0.0
      %139 = vmatpush1.msra.mxu0 %v113
      %140 = vmatprep.subr.mxu0 0.0
      %141 = vmatpush1.msra.mxu0 0.0
      %142 = vmatprep.subr.mxu0 0.0
      %143 = vmatpush1.msra.mxu0 0.0
      %144 = vmatprep.subr.mxu0 0.0
      %145 = vmatpush1.msra.mxu0 0.0
      %146 = vmatprep.subr.mxu0 0.0
      %147 = vmatpush1.msra.mxu0 0.0
      %148 = vmatprep.subr.mxu0 0.0
      %149 = vmatpush1.msra.mxu0 0.0
      %150 = vmatprep.subr.mxu0 0.0
      %151 = vmatpush1.msra.mxu0 0.0
      %152 = vmatprep.subr.mxu0 0.0
      %153 = vmatpush1.msra.mxu0 0.0
      %154 = vmatprep.subr.mxu0 0.0
      %155 = vmatpush1.msra.mxu0 0.0
      %156 = vmatprep.subr.mxu0 0.0
      %157 = vmatpush1.msra.mxu0 0.0
      %158 = vmatprep.subr.mxu0 0.0
      %159 = vmatpush1.msra.mxu0 0.0
      %160 = vmatprep.subr.mxu0 0.0
      %161 = vmatpush1.msra.mxu0 0.0
      %162 = vmatprep.subr.mxu0 0.0
      %163 = vmatpush1.msra.mxu0 0.0
      %164 = vmatprep.subr.mxu0 0.0
      %165 = vmatpush1.msra.mxu0 0.0
      %166 = vmatprep.subr.mxu0 0.0
      %167 = vmatpush1.msra.mxu0 0.0
      %168 = vmatprep.subr.mxu0 0.0
      %169 = vmatpush1.msra.mxu0 0.0
      %170 = vmatprep.subr.mxu0 0.0
      %171 = vmatpush1.msra.mxu0 0.0
      %172 = vmatprep.subr.mxu0 0.0
      %173 = vmatpush1.msra.mxu0 0.0
      %174 = vmatprep.subr.mxu0 0.0
      %175 = vmatpush1.msra.mxu0 0.0
      %176 = vmatprep.subr.mxu0 0.0
      %177 = vmatpush1.msra.mxu0 0.0
      %178 = vmatprep.subr.mxu0 0.0
      %179 = vmatpush1.msra.mxu0 0.0
      %180 = vmatprep.subr.mxu0 0.0
      %181 = vmatpush1.msra.mxu0 0.0
      %182 = vmatprep.subr.mxu0 0.0
      %183 = vmatpush1.msra.mxu0 0.0
      %184 = vmatprep.subr.mxu0 0.0
      %185 = vmatpush1.msra.mxu0 0.0
      %186 = vmatprep.subr.mxu0 0.0
      %187 = vmatpush1.msra.mxu0 0.0
      %188 = vmatprep.subr.mxu0 0.0
      %189 = vmatpush1.msra.mxu0 0.0
      %190 = vmatprep.subr.mxu0 0.0
      %191 = vmatpush1.msra.mxu0 0.0
      %192 = vmatprep.mubr.f32.mxu0 0.0
      %193 = vmatmul.mubr.f32.gmra.mrb[0].mxu0 %v123
      %v194 = vpop.f32.mrb[0].mxu0
      %v195 = vadd.f32 %v119, %v194
      %v196 = vpop.f32.mrb[0].mxu0
      %197 = vmatprep.mubr.f32.mxu0 0.0
      %198 = vmatmul.mubr.f32.gmra.mrb[0].mxu0 %v126
      %v199 = vpop.f32.mrb[0].mxu0
      %v200 = vadd.f32 %v119, %v199
      %v201 = vpop.f32.mrb[0].mxu0
      %202 = vdwg.mxu0
      %v203 = vmul.f32 %v195, 0.17677669
      %v204 = vmul.f32 %v200, 0.17677669
      %vm205 = vcmask 261120
      %206 = vst.msk [vmem:[#allocation2] sm:$0xff] %vm205, %v203
      %207 = vst.msk [vmem:[#allocation2 + $0x8] sm:$0xff] %vm205, %v204
    $region53: #{tpu_custom_call.1} parent=1 // pred_fallthru
      _
    %v208 = vld [vmem:[#allocation6] sm:$0xff]
    %v209 = vld [vmem:[#allocation6 + $0x8] sm:$0xff]
    %v210 = vld [vmem:[#allocation6 + $0x10] sm:$0xff]
    %v211 = vld [vmem:[#allocation6 + $0x18] sm:$0xff]
    %v212 = vld [vmem:[#allocation6 + $0x20] sm:$0xff]
    %v213 = vld [vmem:[#allocation6 + $0x28] sm:$0xff]
    %v214 = vld [vmem:[#allocation6 + $0x30] sm:$0xff]
    %v215 = vld [vmem:[#allocation6 + $0x38] sm:$0xff]
    %v216 = vld [vmem:[#allocation6 + $0x40] sm:$0xff]
    %v217 = vld [vmem:[#allocation6 + $0x48] sm:$0xff]
    %v218 = vld [vmem:[#allocation6 + $0x50] sm:$0xff]
    %v219 = vld [vmem:[#allocation6 + $0x58] sm:$0xff]
    %v220 = vld [vmem:[#allocation6 + $0x60] sm:$0xff]
    %v221 = vld [vmem:[#allocation6 + $0x68] sm:$0xff]
    %v222 = vld [vmem:[#allocation6 + $0x70] sm:$0xff]
    %v223 = vld [vmem:[#allocation6 + $0x78] sm:$0xff]
    %v224 = vld [vmem:[#allocation6 + $0x80] sm:$0xff]
    %v225 = vld [vmem:[#allocation6 + $0x88] sm:$0xff]
    %v226 = vld [vmem:[#allocation6 + $0x90] sm:$0xff]
    %v227 = vld [vmem:[#allocation6 + $0x98] sm:$0xff]
    %v228 = vld [vmem:[#allocation6 + $0xa0] sm:$0xff]
    %v229 = vld [vmem:[#allocation6 + $0xa8] sm:$0xff]
    %v230 = vld [vmem:[#allocation6 + $0xb0] sm:$0xff]
    %v231 = vld [vmem:[#allocation6 + $0xb8] sm:$0xff]
    %v232 = vld [vmem:[#allocation6 + $0xc0] sm:$0xff]
    %v233 = vld [vmem:[#allocation6 + $0xc8] sm:$0xff]
    %v234 = vld [vmem:[#allocation6 + $0xd0] sm:$0xff]
    %v235 = vld [vmem:[#allocation6 + $0xd8] sm:$0xff]
    %v236 = vld [vmem:[#allocation6 + $0xe0] sm:$0xff]
    %v237 = vld [vmem:[#allocation6 + $0xe8] sm:$0xff]
    %v238 = vld [vmem:[#allocation6 + $0xf0] sm:$0xff]
    %v239 = vld [vmem:[#allocation6 + $0xf8] sm:$0xff]
    %v240 = vld [vmem:[#allocation11] sm:$0xff]
    %v241 = vld [vmem:[#allocation11 + $0x8] sm:$0xff]
    %v242 = vld [vmem:[#allocation11 + $0x10] sm:$0xff]
    %v243 = vld [vmem:[#allocation11 + $0x18] sm:$0xff]
    %v244 = vld [vmem:[#allocation12] sm:$0x1]
    %v246 = vlaneseq
    %v247 = vshrl.u32 %v246, 7
    %v248 = vsub.s32 0, %v247
    %v249 = vrot.slane %v244, %v248
    %vm251 = vcmask 261120
    %v253 = vsel %vm251, %v208, 0
    %v256 = vsel %vm251, %v209, 0
    %v259 = vsel %vm251, %v210, 0
    %v262 = vsel %vm251, %v211, 0
    %v265 = vsel %vm251, %v212, 0
    %v268 = vsel %vm251, %v213, 0
    %v271 = vsel %vm251, %v214, 0
    %v274 = vsel %vm251, %v215, 0
    %v277 = vsel %vm251, %v216, 0
    %v280 = vsel %vm251, %v217, 0
    %v283 = vsel %vm251, %v218, 0
    %v286 = vsel %vm251, %v219, 0
    %v289 = vsel %vm251, %v220, 0
    %v292 = vsel %vm251, %v221, 0
    %v295 = vsel %vm251, %v222, 0
    %v298 = vsel %vm251, %v223, 0
    %v301 = vsel %vm251, %v224, 0
    %v304 = vsel %vm251, %v225, 0
    %v307 = vsel %vm251, %v226, 0
    %v310 = vsel %vm251, %v227, 0
    %v313 = vsel %vm251, %v228, 0
    %v316 = vsel %vm251, %v229, 0
    %v319 = vsel %vm251, %v230, 0
    %v322 = vsel %vm251, %v231, 0
    %v325 = vsel %vm251, %v232, 0
    %v328 = vsel %vm251, %v233, 0
    %v331 = vsel %vm251, %v234, 0
    %v334 = vsel %vm251, %v235, 0
    %v337 = vsel %vm251, %v236, 0
    %v340 = vsel %vm251, %v237, 0
    %v343 = vsel %vm251, %v238, 0
    %v346 = vsel %vm251, %v239, 0
    %348 = vmatprep.subr.mxu0 0.0
    %349 = vmatpush1.msra.mxu0 %v240
    %350 = vmatprep.subr.mxu0 0.0
    %351 = vmatpush1.msra.mxu0 %v241
    %352 = vmatprep.subr.mxu0 0.0
    %353 = vmatpush1.msra.mxu0 %v242
    %354 = vmatprep.subr.mxu0 0.0
    %355 = vmatpush1.msra.mxu0 %v243
    %356 = vmatprep.subr.mxu0 0.0
    %357 = vmatpush1.msra.mxu0 0.0
    %358 = vmatprep.subr.mxu0 0.0
    %359 = vmatpush1.msra.mxu0 0.0
    %360 = vmatprep.subr.mxu0 0.0
    %361 = vmatpush1.msra.mxu0 0.0
    %362 = vmatprep.subr.mxu0 0.0
    %363 = vmatpush1.msra.mxu0 0.0
    %364 = vmatprep.subr.mxu0 0.0
    %365 = vmatpush1.msra.mxu0 0.0
    %366 = vmatprep.subr.mxu0 0.0
    %367 = vmatpush1.msra.mxu0 0.0
    %368 = vmatprep.subr.mxu0 0.0
    %369 = vmatpush1.msra.mxu0 0.0
    %370 = vmatprep.subr.mxu0 0.0
    %371 = vmatpush1.msra.mxu0 0.0
    %372 = vmatprep.subr.mxu0 0.0
    %373 = vmatpush1.msra.mxu0 0.0
    %374 = vmatprep.subr.mxu0 0.0
    %375 = vmatpush1.msra.mxu0 0.0
    %376 = vmatprep.subr.mxu0 0.0
    %377 = vmatpush1.msra.mxu0 0.0
    %378 = vmatprep.subr.mxu0 0.0
    %379 = vmatpush1.msra.mxu0 0.0
    %380 = vmatprep.subr.mxu0 0.0
    %381 = vmatpush1.msra.mxu0 0.0
    %382 = vmatprep.subr.mxu0 0.0
    %383 = vmatpush1.msra.mxu0 0.0
    %384 = vmatprep.subr.mxu0 0.0
    %385 = vmatpush1.msra.mxu0 0.0
    %386 = vmatprep.subr.mxu0 0.0
    %387 = vmatpush1.msra.mxu0 0.0
    %388 = vmatprep.subr.mxu0 0.0
    %389 = vmatpush1.msra.mxu0 0.0
    %390 = vmatprep.subr.mxu0 0.0
    %391 = vmatpush1.msra.mxu0 0.0
    %392 = vmatprep.subr.mxu0 0.0
    %393 = vmatpush1.msra.mxu0 0.0
    %394 = vmatprep.subr.mxu0 0.0
    %395 = vmatpush1.msra.mxu0 0.0
    %396 = vmatprep.subr.mxu0 0.0
    %397 = vmatpush1.msra.mxu0 0.0
    %398 = vmatprep.subr.mxu0 0.0
    %399 = vmatpush1.msra.mxu0 0.0
    %400 = vmatprep.subr.mxu0 0.0
    %401 = vmatpush1.msra.mxu0 0.0
    %402 = vmatprep.subr.mxu0 0.0
    %403 = vmatpush1.msra.mxu0 0.0
    %404 = vmatprep.subr.mxu0 0.0
    %405 = vmatpush1.msra.mxu0 0.0
    %406 = vmatprep.subr.mxu0 0.0
    %407 = vmatpush1.msra.mxu0 0.0
    %408 = vmatprep.subr.mxu0 0.0
    %409 = vmatpush1.msra.mxu0 0.0
    %410 = vmatprep.subr.mxu0 0.0
    %411 = vmatpush1.msra.mxu0 0.0
    %412 = vmatprep.mubr.f32.mxu0 0.0
    %413 = vmatmul.mubr.f32.gmra.mrb[0].mxu0 %v253
    %v414 = vpop.f32.mrb[0].mxu0
    %v415 = vadd.f32 %v249, %v414
    %v416 = vpop.f32.mrb[0].mxu0
    %417 = vmatprep.mubr.f32.mxu0 0.0
    %418 = vmatmul.mubr.f32.gmra.mrb[0].mxu0 %v256
    %v419 = vpop.f32.mrb[0].mxu0
    %v420 = vadd.f32 %v249, %v419
    %v421 = vpop.f32.mrb[0].mxu0
    %422 = vmatprep.mubr.f32.mxu0 0.0
    %423 = vmatmul.mubr.f32.gmra.mrb[0].mxu0 %v259
    %v424 = vpop.f32.mrb[0].mxu0
    %v425 = vadd.f32 %v249, %v424
    %v426 = vpop.f32.mrb[0].mxu0
    %427 = vmatprep.mubr.f32.mxu0 0.0
    %428 = vmatmul.mubr.f32.gmra.mrb[0].mxu0 %v262
    %v429 = vpop.f32.mrb[0].mxu0
    %v430 = vadd.f32 %v249, %v429
    %v431 = vpop.f32.mrb[0].mxu0
    %432 = vmatprep.mubr.f32.mxu0 0.0
    %433 = vmatmul.mubr.f32.gmra.mrb[0].mxu0 %v265
    %v434 = vpop.f32.mrb[0].mxu0
    %v435 = vadd.f32 %v249, %v434
    %v436 = vpop.f32.mrb[0].mxu0
    %437 = vmatprep.mubr.f32.mxu0 0.0
    %438 = vmatmul.mubr.f32.gmra.mrb[0].mxu0 %v268
    %v439 = vpop.f32.mrb[0].mxu0
    %v440 = vadd.f32 %v249, %v439
    %v441 = vpop.f32.mrb[0].mxu0
    %442 = vmatprep.mubr.f32.mxu0 0.0
    %443 = vmatmul.mubr.f32.gmra.mrb[0].mxu0 %v271
    %v444 = vpop.f32.mrb[0].mxu0
    %v445 = vadd.f32 %v249, %v444
    %v446 = vpop.f32.mrb[0].mxu0
    %447 = vmatprep.mubr.f32.mxu0 0.0
    %448 = vmatmul.mubr.f32.gmra.mrb[0].mxu0 %v274
    %v449 = vpop.f32.mrb[0].mxu0
    %v450 = vadd.f32 %v249, %v449
    %v451 = vpop.f32.mrb[0].mxu0
    %452 = vmatprep.mubr.f32.mxu0 0.0
    %453 = vmatmul.mubr.f32.gmra.mrb[0].mxu0 %v277
    %v454 = vpop.f32.mrb[0].mxu0
    %v455 = vadd.f32 %v249, %v454
    %v456 = vpop.f32.mrb[0].mxu0
    %457 = vmatprep.mubr.f32.mxu0 0.0
    %458 = vmatmul.mubr.f32.gmra.mrb[0].mxu0 %v280
    %v459 = vpop.f32.mrb[0].mxu0
    %v460 = vadd.f32 %v249, %v459
    %v461 = vpop.f32.mrb[0].mxu0
    %462 = vmatprep.mubr.f32.mxu0 0.0
    %463 = vmatmul.mubr.f32.gmra.mrb[0].mxu0 %v283
    %v464 = vpop.f32.mrb[0].mxu0
    %v465 = vadd.f32 %v249, %v464
    %v466 = vpop.f32.mrb[0].mxu0
    %467 = vmatprep.mubr.f32.mxu0 0.0
    %468 = vmatmul.mubr.f32.gmra.mrb[0].mxu0 %v286
    %v469 = vpop.f32.mrb[0].mxu0
    %v470 = vadd.f32 %v249, %v469
    %v471 = vpop.f32.mrb[0].mxu0
    %472 = vmatprep.mubr.f32.mxu0 0.0
    %473 = vmatmul.mubr.f32.gmra.mrb[0].mxu0 %v289
    %v474 = vpop.f32.mrb[0].mxu0
    %v475 = vadd.f32 %v249, %v474
    %v476 = vpop.f32.mrb[0].mxu0
    %477 = vmatprep.mubr.f32.mxu0 0.0
    %478 = vmatmul.mubr.f32.gmra.mrb[0].mxu0 %v292
    %v479 = vpop.f32.mrb[0].mxu0
    %v480 = vadd.f32 %v249, %v479
    %v481 = vpop.f32.mrb[0].mxu0
    %482 = vmatprep.mubr.f32.mxu0 0.0
    %483 = vmatmul.mubr.f32.gmra.mrb[0].mxu0 %v295
    %v484 = vpop.f32.mrb[0].mxu0
    %v485 = vadd.f32 %v249, %v484
    %v486 = vpop.f32.mrb[0].mxu0
    %487 = vmatprep.mubr.f32.mxu0 0.0
    %488 = vmatmul.mubr.f32.gmra.mrb[0].mxu0 %v298
    %v489 = vpop.f32.mrb[0].mxu0
    %v490 = vadd.f32 %v249, %v489
    %v491 = vpop.f32.mrb[0].mxu0
    %492 = vmatprep.mubr.f32.mxu0 0.0
    %493 = vmatmul.mubr.f32.gmra.mrb[0].mxu0 %v301
    %v494 = vpop.f32.mrb[0].mxu0
    %v495 = vadd.f32 %v249, %v494
    %v496 = vpop.f32.mrb[0].mxu0
    %497 = vmatprep.mubr.f32.mxu0 0.0
    %498 = vmatmul.mubr.f32.gmra.mrb[0].mxu0 %v304
    %v499 = vpop.f32.mrb[0].mxu0
    %v500 = vadd.f32 %v249, %v499
    %v501 = vpop.f32.mrb[0].mxu0
    %502 = vmatprep.mubr.f32.mxu0 0.0
    %503 = vmatmul.mubr.f32.gmra.mrb[0].mxu0 %v307
    %v504 = vpop.f32.mrb[0].mxu0
    %v505 = vadd.f32 %v249, %v504
    %v506 = vpop.f32.mrb[0].mxu0
    %507 = vmatprep.mubr.f32.mxu0 0.0
    %508 = vmatmul.mubr.f32.gmra.mrb[0].mxu0 %v310
    %v509 = vpop.f32.mrb[0].mxu0
    %v510 = vadd.f32 %v249, %v509
    %v511 = vpop.f32.mrb[0].mxu0
    %512 = vmatprep.mubr.f32.mxu0 0.0
    %513 = vmatmul.mubr.f32.gmra.mrb[0].mxu0 %v313
    %v514 = vpop.f32.mrb[0].mxu0
    %v515 = vadd.f32 %v249, %v514
    %v516 = vpop.f32.mrb[0].mxu0
    %517 = vmatprep.mubr.f32.mxu0 0.0
    %518 = vmatmul.mubr.f32.gmra.mrb[0].mxu0 %v316
    %v519 = vpop.f32.mrb[0].mxu0
    %v520 = vadd.f32 %v249, %v519
    %v521 = vpop.f32.mrb[0].mxu0
    %522 = vmatprep.mubr.f32.mxu0 0.0
    %523 = vmatmul.mubr.f32.gmra.mrb[0].mxu0 %v319
    %v524 = vpop.f32.mrb[0].mxu0
    %v525 = vadd.f32 %v249, %v524
    %v526 = vpop.f32.mrb[0].mxu0
    %527 = vmatprep.mubr.f32.mxu0 0.0
    %528 = vmatmul.mubr.f32.gmra.mrb[0].mxu0 %v322
    %v529 = vpop.f32.mrb[0].mxu0
    %v530 = vadd.f32 %v249, %v529
    %v531 = vpop.f32.mrb[0].mxu0
    %532 = vmatprep.mubr.f32.mxu0 0.0
    %533 = vmatmul.mubr.f32.gmra.mrb[0].mxu0 %v325
    %v534 = vpop.f32.mrb[0].mxu0
    %v535 = vadd.f32 %v249, %v534
    %v536 = vpop.f32.mrb[0].mxu0
    %537 = vmatprep.mubr.f32.mxu0 0.0
    %538 = vmatmul.mubr.f32.gmra.mrb[0].mxu0 %v328
    %v539 = vpop.f32.mrb[0].mxu0
    %v540 = vadd.f32 %v249, %v539
    %v541 = vpop.f32.mrb[0].mxu0
    %542 = vmatprep.mubr.f32.mxu0 0.0
    %543 = vmatmul.mubr.f32.gmra.mrb[0].mxu0 %v331
    %v544 = vpop.f32.mrb[0].mxu0
    %v545 = vadd.f32 %v249, %v544
    %v546 = vpop.f32.mrb[0].mxu0
    %547 = vmatprep.mubr.f32.mxu0 0.0
    %548 = vmatmul.mubr.f32.gmra.mrb[0].mxu0 %v334
    %v549 = vpop.f32.mrb[0].mxu0
    %v550 = vadd.f32 %v249, %v549
    %v551 = vpop.f32.mrb[0].mxu0
    %552 = vmatprep.mubr.f32.mxu0 0.0
    %553 = vmatmul.mubr.f32.gmra.mrb[0].mxu0 %v337
    %v554 = vpop.f32.mrb[0].mxu0
    %v555 = vadd.f32 %v249, %v554
    %v556 = vpop.f32.mrb[0].mxu0
    %557 = vmatprep.mubr.f32.mxu0 0.0
    %558 = vmatmul.mubr.f32.gmra.mrb[0].mxu0 %v340
    %v559 = vpop.f32.mrb[0].mxu0
    %v560 = vadd.f32 %v249, %v559
    %v561 = vpop.f32.mrb[0].mxu0
    %562 = vmatprep.mubr.f32.mxu0 0.0
    %563 = vmatmul.mubr.f32.gmra.mrb[0].mxu0 %v343
    %v564 = vpop.f32.mrb[0].mxu0
    %v565 = vadd.f32 %v249, %v564
    %v566 = vpop.f32.mrb[0].mxu0
    %567 = vmatprep.mubr.f32.mxu0 0.0
    %568 = vmatmul.mubr.f32.gmra.mrb[0].mxu0 %v346
    %v569 = vpop.f32.mrb[0].mxu0
    %v570 = vadd.f32 %v249, %v569
    %v571 = vpop.f32.mrb[0].mxu0
    %572 = vdwg.mxu0
    %v573 = vld [vmem:[#allocation2] sm:$0xff]
    %v574 = vld [vmem:[#allocation2 + $0x8] sm:$0xff]
    %v576 = vsel %vm251, %v573, 0
    %v579 = vsel %vm251, %v415, 0
    %v582 = vsel %vm251, %v420, 0
    %v585 = vsel %vm251, %v425, 0
    %v588 = vsel %vm251, %v430, 0
    %v591 = vsel %vm251, %v435, 0
    %v594 = vsel %vm251, %v440, 0
    %v597 = vsel %vm251, %v445, 0
    %v600 = vsel %vm251, %v450, 0
    %v603 = vsel %vm251, %v455, 0
    %v606 = vsel %vm251, %v460, 0
    %v609 = vsel %vm251, %v465, 0
    %v612 = vsel %vm251, %v470, 0
    %v615 = vsel %vm251, %v475, 0
    %v618 = vsel %vm251, %v480, 0
    %v621 = vsel %vm251, %v485, 0
    %v624 = vsel %vm251, %v490, 0
    %626 = vmatprep.subr.mxu0 0.0
    %627 = vmatpush1.xpose.msra.mxu0 %v579
    %628 = vmatprep.subr.mxu0 0.0
    %629 = vmatpush1.xpose.msra.mxu0 %v582
    %630 = vmatprep.subr.mxu0 0.0
    %631 = vmatpush1.xpose.msra.mxu0 %v585
    %632 = vmatprep.subr.mxu0 0.0
    %633 = vmatpush1.xpose.msra.mxu0 %v588
    %634 = vmatprep.subr.mxu0 0.0
    %635 = vmatpush1.xpose.msra.mxu0 %v591
    %636 = vmatprep.subr.mxu0 0.0
    %637 = vmatpush1.xpose.msra.mxu0 %v594
    %638 = vmatprep.subr.mxu0 0.0
    %639 = vmatpush1.xpose.msra.mxu0 %v597
    %640 = vmatprep.subr.mxu0 0.0
    %641 = vmatpush1.xpose.msra.mxu0 %v600
    %642 = vmatprep.subr.mxu0 0.0
    %643 = vmatpush1.xpose.msra.mxu0 %v603
    %644 = vmatprep.subr.mxu0 0.0
    %645 = vmatpush1.xpose.msra.mxu0 %v606
    %646 = vmatprep.subr.mxu0 0.0
    %647 = vmatpush1.xpose.msra.mxu0 %v609
    %648 = vmatprep.subr.mxu0 0.0
    %649 = vmatpush1.xpose.msra.mxu0 %v612
    %650 = vmatprep.subr.mxu0 0.0
    %651 = vmatpush1.xpose.msra.mxu0 %v615
    %652 = vmatprep.subr.mxu0 0.0
    %653 = vmatpush1.xpose.msra.mxu0 %v618
    %654 = vmatprep.subr.mxu0 0.0
    %655 = vmatpush1.xpose.msra.mxu0 %v621
    %656 = vmatprep.subr.mxu0 0.0
    %657 = vmatpush1.xpose.msra.mxu0 %v624
    %658 = vmatprep.subr.mxu0 0.0
    %659 = vmatpush1.xpose.msra.mxu0 0.0
    %660 = vmatprep.subr.mxu0 0.0
    %661 = vmatpush1.xpose.msra.mxu0 0.0
    %662 = vmatprep.subr.mxu0 0.0
    %663 = vmatpush1.xpose.msra.mxu0 0.0
    %664 = vmatprep.subr.mxu0 0.0
    %665 = vmatpush1.xpose.msra.mxu0 0.0
    %666 = vmatprep.subr.mxu0 0.0
    %667 = vmatpush1.xpose.msra.mxu0 0.0
    %668 = vmatprep.subr.mxu0 0.0
    %669 = vmatpush1.xpose.msra.mxu0 0.0
    %670 = vmatprep.subr.mxu0 0.0
    %671 = vmatpush1.xpose.msra.mxu0 0.0
    %672 = vmatprep.subr.mxu0 0.0
    %673 = vmatpush1.xpose.msra.mxu0 0.0
    %674 = vmatprep.subr.mxu0 0.0
    %675 = vmatpush1.xpose.msra.mxu0 0.0
    %676 = vmatprep.subr.mxu0 0.0
    %677 = vmatpush1.xpose.msra.mxu0 0.0
    %678 = vmatprep.subr.mxu0 0.0
    %679 = vmatpush1.xpose.msra.mxu0 0.0
    %680 = vmatprep.subr.mxu0 0.0
    %681 = vmatpush1.xpose.msra.mxu0 0.0
    %682 = vmatprep.subr.mxu0 0.0
    %683 = vmatpush1.xpose.msra.mxu0 0.0
    %684 = vmatprep.subr.mxu0 0.0
    %685 = vmatpush1.xpose.msra.mxu0 0.0
    %686 = vmatprep.subr.mxu0 0.0
    %687 = vmatpush1.xpose.msra.mxu0 0.0
    %688 = vmatprep.subr.mxu0 0.0
    %689 = vmatpush1.xpose.msra.mxu0 0.0
    %690 = vmatprep.mubr.f32.mxu0 0.0
    %691 = vmatmul.mubr.f32.gmra.mrb[0].mxu0 %v576
    %v692 = vpop.f32.mrb[0].mxu0
    %v693 = vadd.f32 0.0, %v692
    %v694 = vpop.f32.mrb[0].mxu0
    %695 = vdwg.mxu0
    %v697 = vsel %vm251, %v574, 0
    %v700 = vsel %vm251, %v495, 0
    %v703 = vsel %vm251, %v500, 0
    %v706 = vsel %vm251, %v505, 0
    %v709 = vsel %vm251, %v510, 0
    %v712 = vsel %vm251, %v515, 0
    %v715 = vsel %vm251, %v520, 0
    %v718 = vsel %vm251, %v525, 0
    %v721 = vsel %vm251, %v530, 0
    %v724 = vsel %vm251, %v535, 0
    %v727 = vsel %vm251, %v540, 0
    %v730 = vsel %vm251, %v545, 0
    %v733 = vsel %vm251, %v550, 0
    %v736 = vsel %vm251, %v555, 0
    %v739 = vsel %vm251, %v560, 0
    %v742 = vsel %vm251, %v565, 0
    %v745 = vsel %vm251, %v570, 0
    %747 = vmatprep.subr.mxu0 0.0
    %748 = vmatpush1.xpose.msra.mxu0 %v700
    %749 = vmatprep.subr.mxu0 0.0
    %750 = vmatpush1.xpose.msra.mxu0 %v703
    %751 = vmatprep.subr.mxu0 0.0
    %752 = vmatpush1.xpose.msra.mxu0 %v706
    %753 = vmatprep.subr.mxu0 0.0
    %754 = vmatpush1.xpose.msra.mxu0 %v709
    %755 = vmatprep.subr.mxu0 0.0
    %756 = vmatpush1.xpose.msra.mxu0 %v712
    %757 = vmatprep.subr.mxu0 0.0
    %758 = vmatpush1.xpose.msra.mxu0 %v715
    %759 = vmatprep.subr.mxu0 0.0
    %760 = vmatpush1.xpose.msra.mxu0 %v718
    %761 = vmatprep.subr.mxu0 0.0
    %762 = vmatpush1.xpose.msra.mxu0 %v721
    %763 = vmatprep.subr.mxu0 0.0
    %764 = vmatpush1.xpose.msra.mxu0 %v724
    %765 = vmatprep.subr.mxu0 0.0
    %766 = vmatpush1.xpose.msra.mxu0 %v727
    %767 = vmatprep.subr.mxu0 0.0
    %768 = vmatpush1.xpose.msra.mxu0 %v730
    %769 = vmatprep.subr.mxu0 0.0
    %770 = vmatpush1.xpose.msra.mxu0 %v733
    %771 = vmatprep.subr.mxu0 0.0
    %772 = vmatpush1.xpose.msra.mxu0 %v736
    %773 = vmatprep.subr.mxu0 0.0
    %774 = vmatpush1.xpose.msra.mxu0 %v739
    %775 = vmatprep.subr.mxu0 0.0
    %776 = vmatpush1.xpose.msra.mxu0 %v742
    %777 = vmatprep.subr.mxu0 0.0
    %778 = vmatpush1.xpose.msra.mxu0 %v745
    %779 = vmatprep.subr.mxu0 0.0
    %780 = vmatpush1.xpose.msra.mxu0 0.0
    %781 = vmatprep.subr.mxu0 0.0
    %782 = vmatpush1.xpose.msra.mxu0 0.0
    %783 = vmatprep.subr.mxu0 0.0
    %784 = vmatpush1.xpose.msra.mxu0 0.0
    %785 = vmatprep.subr.mxu0 0.0
    %786 = vmatpush1.xpose.msra.mxu0 0.0
    %787 = vmatprep.subr.mxu0 0.0
    %788 = vmatpush1.xpose.msra.mxu0 0.0
    %789 = vmatprep.subr.mxu0 0.0
    %790 = vmatpush1.xpose.msra.mxu0 0.0
    %791 = vmatprep.subr.mxu0 0.0
    %792 = vmatpush1.xpose.msra.mxu0 0.0
    %793 = vmatprep.subr.mxu0 0.0
    %794 = vmatpush1.xpose.msra.mxu0 0.0
    %795 = vmatprep.subr.mxu0 0.0
    %796 = vmatpush1.xpose.msra.mxu0 0.0
    %797 = vmatprep.subr.mxu0 0.0
    %798 = vmatpush1.xpose.msra.mxu0 0.0
    %799 = vmatprep.subr.mxu0 0.0
    %800 = vmatpush1.xpose.msra.mxu0 0.0
    %801 = vmatprep.subr.mxu0 0.0
    %802 = vmatpush1.xpose.msra.mxu0 0.0
    %803 = vmatprep.subr.mxu0 0.0
    %804 = vmatpush1.xpose.msra.mxu0 0.0
    %805 = vmatprep.subr.mxu0 0.0
    %806 = vmatpush1.xpose.msra.mxu0 0.0
    %807 = vmatprep.subr.mxu0 0.0
    %808 = vmatpush1.xpose.msra.mxu0 0.0
    %809 = vmatprep.subr.mxu0 0.0
    %810 = vmatpush1.xpose.msra.mxu0 0.0
    %811 = vmatprep.mubr.f32.mxu0 0.0
    %812 = vmatmul.mubr.f32.gmra.mrb[0].mxu0 %v697
    %v813 = vpop.f32.mrb[0].mxu0
    %v814 = vadd.f32 0.0, %v813
    %v815 = vpop.f32.mrb[0].mxu0
    %816 = vdwg.mxu0
    %817 = vst [vmem:[#allocation14] sm:$0xff] %v693
    %818 = vst [vmem:[#allocation14 + $0x8] sm:$0xff] %v814
    // Predicated region
    $region54: #{tpu_custom_call.1} parent=1 // pred_check
      _
    $region55: #{tpu_custom_call.1} parent=1 // pred_check_branch
      %820 = sbr.rel (0) target = $region57
    $region56: #{tpu_custom_call.1} parent=1 // pred_region
      %s822 = ssub.s32 256, 256
      %823 = vsyncadd [#allocation5], %s822
      %s824 = sshll.u32 [#allocation14], 4
      %s825 = int_to_ptr.vmem [resolvable:$true] %s824
      %830 = dma.vmem_to_hbm [thread:$0]  %s825, 256, %s6, [#allocation5], 128, 128, 8
    $region57: #{tpu_custom_call.1} parent=1 // pred_fallthru
      _
    // Predicated region
    $region58: #{tpu_custom_call.1} parent=1 // pred_check
      _
    $region59: #{tpu_custom_call.1} parent=1 // pred_check_branch
      %832 = sbr.rel (0) target = $region61
    $region60: #{tpu_custom_call.1} parent=1 // pred_region
      %833 = dma.done [#allocation5], 256
    $region61: #{tpu_custom_call.1} parent=1 // pred_fallthru
      _
    %834 = vsyncpa [#allocation4], 1
    %835 = vsyncpa [#allocation7], 1
    %836 = vsyncpa [#allocation10], 1
    %837 = vsyncpa [#allocation13], 1
    %838 = vsyncpa [#allocation5], 1

</llo_original>
